<compile_context>
chip_gen: v7x
topology: tpu7x:2x2x1
jax: 0.10.0
libtpu: 0.0.40
codegen_flags: <defaults>
</compile_context>

<pallas_src>
import functools

import jax
import jax.numpy as jnp
from jax.experimental import pallas as pl
from jax.experimental.pallas import tpu as pltpu

LANE = 128
SUBLANE = 8


def _round_up(n, m):
    return ((n + m - 1) // m) * m


def dqn_kernel(x_ref, w1_ref, b1_ref, w2_ref, b2_ref, w3_ref, b3_ref, o_ref):
    # Layer 1: Linear(in, 256) + ReLU   (bf16 operands, f32 accumulate)
    h1 = jnp.dot(x_ref[...], w1_ref[...], preferred_element_type=jnp.float32)
    h1 = jnp.maximum(h1 + b1_ref[...], 0.0).astype(jnp.bfloat16)
    # Layer 2: Linear(256, 128) + ReLU
    h2 = jnp.dot(h1, w2_ref[...], preferred_element_type=jnp.float32)
    h2 = jnp.maximum(h2 + b2_ref[...], 0.0).astype(jnp.bfloat16)
    # Layer 3: Linear(128, out)  (narrow store at the real output width)
    out = jnp.dot(h2, w3_ref[...], preferred_element_type=jnp.float32)
    o_ref[...] = (out + b3_ref[...]).astype(o_ref.dtype)


def _choose_batch_tile(B, batch_tile):
    """Pick (TB, Bp). For tiny batches use a full-array block (no padding).
    Otherwise aim for >= 2 tiles (v7x megacore), capped at batch_tile rows."""
    if B <= SUBLANE:
        return B, B
    half = _round_up(-(-B // 2), SUBLANE)
    TB = min(batch_tile, half)
    Bp = _round_up(B, TB)
    return TB, Bp


@functools.partial(jax.jit, static_argnames=("batch_tile",))
def dqn_forward(x, params, *, batch_tile=1024):
    """params must come from `prepare_params` (bf16 weights, f32 biases)."""
    w1, b1, w2, b2, w3, b3 = params
    B, in_size = x.shape
    H1 = w1.shape[1]          # 256
    H2 = w2.shape[1]          # 128
    out_size = w3.shape[1]

    TB, Bp = _choose_batch_tile(B, batch_tile)

    xb = x.astype(jnp.bfloat16)
    if Bp != B:
        xb = jnp.pad(xb, ((0, Bp - B), (0, 0)))

    out = pl.pallas_call(
        dqn_kernel,
        out_shape=jax.ShapeDtypeStruct((Bp, out_size), jnp.float32),
        grid=(Bp // TB,),
        in_specs=[
            pl.BlockSpec((TB, in_size), lambda i: (i, 0)),   # x: stream over batch tiles
            pl.BlockSpec((in_size, H1), lambda i: (0, 0)),   # w1: resident
            pl.BlockSpec((1, H1), lambda i: (0, 0)),         # b1: resident
            pl.BlockSpec((H1, H2), lambda i: (0, 0)),        # w2: resident
            pl.BlockSpec((1, H2), lambda i: (0, 0)),         # b2: resident
            pl.BlockSpec((H2, out_size), lambda i: (0, 0)),  # w3: resident (real width)
            pl.BlockSpec((1, out_size), lambda i: (0, 0)),   # b3: resident (real width)
        ],
        out_specs=pl.BlockSpec((TB, out_size), lambda i: (i, 0)),
        compiler_params=pltpu.CompilerParams(
            dimension_semantics=("parallel",),               # megacore split on v7x
        ),
    )(xb, w1, b1, w2, b2, w3, b3)

    if Bp != B:
        out = out[:B]
    return out


def init_params(key, input_size, output_size):
    """Deterministic f32 init mimicking PyTorch nn.Linear defaults:
    U(-1/sqrt(fan_in), 1/sqrt(fan_in)) for both weight and bias."""
    dims = [(input_size, 256), (256, 128), (128, output_size)]
    params = []
    for fan_in, fan_out in dims:
        key, kw, kb = jax.random.split(key, 3)
        bound = 1.0 / jnp.sqrt(fan_in)
        w = jax.random.uniform(kw, (fan_in, fan_out), jnp.float32, -bound, bound)
        b = jax.random.uniform(kb, (1, fan_out), jnp.float32, -bound, bound)
        params += [w, b]
    return params


def prepare_params(params):
    """One-time conversion for the kernel: bf16 weights, f32 biases.
    Done ONCE (not per forward call) — no per-call weight cast/pad traffic."""
    w1, b1, w2, b2, w3, b3 = params
    bf = jnp.bfloat16
    return (w1.astype(bf), b1, w2.astype(bf), b2, w3.astype(bf), b3)


def reference_forward_f32(x, params):
    w1, b1, w2, b2, w3, b3 = params
    h1 = jnp.maximum(x @ w1 + b1, 0.0)
    h2 = jnp.maximum(h1 @ w2 + b2, 0.0)
    return h2 @ w3 + b3


def reference_forward_bf16(x, params):
    """Same bf16-operand / f32-accumulate precision recipe as the kernel."""
    w1, b1, w2, b2, w3, b3 = params
    bf = jnp.bfloat16
    h1 = jnp.dot(x.astype(bf), w1.astype(bf), preferred_element_type=jnp.float32) + b1
    h1 = jnp.maximum(h1, 0.0).astype(bf)
    h2 = jnp.dot(h1, w2.astype(bf), preferred_element_type=jnp.float32) + b2
    h2 = jnp.maximum(h2, 0.0).astype(bf)
    return jnp.dot(h2, w3.astype(bf), preferred_element_type=jnp.float32) + b3


if __name__ == "__main__":
    key = jax.random.PRNGKey(0)
    input_size = 32   # e.g. state-vector dimension
    output_size = 4   # e.g. number of discrete actions

    params = init_params(key, input_size, output_size)
    kernel_params = prepare_params(params)   # hoisted, one-time cast

    # Small inference-style batch (single grid step, no padding).
    key, kx = jax.random.split(key)
    x_small = jax.random.normal(kx, (2, input_size), jnp.float32)
    out_small = jax.block_until_ready(dqn_forward(x_small, kernel_params))
    assert out_small.shape == (2, output_size)
    ref_bf16 = reference_forward_bf16(x_small, params)
    assert jnp.allclose(out_small, ref_bf16, atol=5e-3, rtol=5e-3), \
        "small-batch mismatch vs bf16-precision reference"
    ref_f32 = reference_forward_f32(x_small, params)
    assert jnp.allclose(out_small, ref_f32, atol=5e-2, rtol=5e-2), \
        "small-batch mismatch vs f32 reference"

    # Larger replay-style batch (exercises batch padding and a >=2-step grid).
    key, kx = jax.random.split(key)
    x_big = jax.random.normal(kx, (300, input_size), jnp.float32)
    out_big = jax.block_until_ready(dqn_forward(x_big, kernel_params))
    assert out_big.shape == (300, output_size)
    ref_big = reference_forward_bf16(x_big, params)
    assert jnp.allclose(out_big, ref_big, atol=5e-3, rtol=5e-3), \
        "large-batch mismatch vs bf16-precision reference"

    print("KERNEL_OK")
</pallas_src>

<mosaic_0001>
module attributes {stable_mosaic.version = 11 : i64} {
  func.func @dqn_kernel(%arg0: i32, %arg1: memref<2x32xbf16, #tpu.memory_space<vmem>>, %arg2: memref<32x256xbf16, #tpu.memory_space<vmem>>, %arg3: memref<1x256xf32, #tpu.memory_space<vmem>>, %arg4: memref<256x128xbf16, #tpu.memory_space<vmem>>, %arg5: memref<1x128xf32, #tpu.memory_space<vmem>>, %arg6: memref<128x4xbf16, #tpu.memory_space<vmem>>, %arg7: memref<1x4xf32, #tpu.memory_space<vmem>>, %arg8: memref<2x4xf32, #tpu.memory_space<vmem>>) attributes {dimension_semantics = [#tpu.dimension_semantics<parallel>], iteration_bounds = array<i64: 1>, scalar_prefetch = 0 : i64, scratch_operands = 0 : i64, tpu.core_type = #tpu.core_type<tc>, window_params = [{transform_indices = @transform_0, window_bounds = array<i64: 2, 32>}, {pipeline_mode = #tpu.pipeline_mode<synchronous>, transform_indices = @transform_1, window_bounds = array<i64: 32, 256>}, {pipeline_mode = #tpu.pipeline_mode<synchronous>, transform_indices = @transform_2, window_bounds = array<i64: 1, 256>}, {pipeline_mode = #tpu.pipeline_mode<synchronous>, transform_indices = @transform_3, window_bounds = array<i64: 256, 128>}, {pipeline_mode = #tpu.pipeline_mode<synchronous>, transform_indices = @transform_4, window_bounds = array<i64: 1, 128>}, {pipeline_mode = #tpu.pipeline_mode<synchronous>, transform_indices = @transform_5, window_bounds = array<i64: 128, 4>}, {pipeline_mode = #tpu.pipeline_mode<synchronous>, transform_indices = @transform_6, window_bounds = array<i64: 1, 4>}, {transform_indices = @transform_7, window_bounds = array<i64: 2, 4>}]} {
    %c0 = arith.constant 0 : index
    %c0_0 = arith.constant 0 : index
    %0 = vector.load %arg1[%c0, %c0_0] : memref<2x32xbf16, #tpu.memory_space<vmem>>, vector<2x32xbf16>
    %c0_1 = arith.constant 0 : index
    %c0_2 = arith.constant 0 : index
    %1 = vector.load %arg2[%c0_1, %c0_2] : memref<32x256xbf16, #tpu.memory_space<vmem>>, vector<32x256xbf16>
    %cst = arith.constant dense<0.000000e+00> : vector<2x256xf32>
    %2 = tpu.matmul %0, %1, %cst {dimension_numbers = #tpu.dot_dimension_numbers<[1], [0], [0], [1], [0, 0, 1, 1], [], []>} : vector<2x32xbf16>, vector<32x256xbf16>, vector<2x256xf32> -> vector<2x256xf32>
    %c0_3 = arith.constant 0 : index
    %c0_4 = arith.constant 0 : index
    %3 = vector.load %arg3[%c0_3, %c0_4] : memref<1x256xf32, #tpu.memory_space<vmem>>, vector<1x256xf32>
    %4 = vector.broadcast %3 : vector<1x256xf32> to vector<2x256xf32>
    %5 = arith.addf %2, %4 : vector<2x256xf32>
    %cst_5 = arith.constant 0.000000e+00 : f32
    %6 = vector.broadcast %cst_5 : f32 to vector<2x256xf32>
    %7 = arith.maximumf %5, %6 : vector<2x256xf32>
    %8 = arith.truncf %7 : vector<2x256xf32> to vector<2x256xbf16>
    %c0_6 = arith.constant 0 : index
    %c0_7 = arith.constant 0 : index
    %9 = vector.load %arg4[%c0_6, %c0_7] : memref<256x128xbf16, #tpu.memory_space<vmem>>, vector<256x128xbf16>
    %cst_8 = arith.constant dense<0.000000e+00> : vector<2x128xf32>
    %10 = tpu.matmul %8, %9, %cst_8 {dimension_numbers = #tpu.dot_dimension_numbers<[1], [0], [0], [1], [0, 0, 1, 1], [], []>} : vector<2x256xbf16>, vector<256x128xbf16>, vector<2x128xf32> -> vector<2x128xf32>
    %c0_9 = arith.constant 0 : index
    %c0_10 = arith.constant 0 : index
    %11 = vector.load %arg5[%c0_9, %c0_10] : memref<1x128xf32, #tpu.memory_space<vmem>>, vector<1x128xf32>
    %12 = vector.broadcast %11 : vector<1x128xf32> to vector<2x128xf32>
    %13 = arith.addf %10, %12 : vector<2x128xf32>
    %cst_11 = arith.constant 0.000000e+00 : f32
    %14 = vector.broadcast %cst_11 : f32 to vector<2x128xf32>
    %15 = arith.maximumf %13, %14 : vector<2x128xf32>
    %16 = arith.truncf %15 : vector<2x128xf32> to vector<2x128xbf16>
    %c0_12 = arith.constant 0 : index
    %c0_13 = arith.constant 0 : index
    %17 = vector.load %arg6[%c0_12, %c0_13] : memref<128x4xbf16, #tpu.memory_space<vmem>>, vector<128x4xbf16>
    %cst_14 = arith.constant dense<0.000000e+00> : vector<2x4xf32>
    %18 = tpu.matmul %16, %17, %cst_14 {dimension_numbers = #tpu.dot_dimension_numbers<[1], [0], [0], [1], [0, 0, 1, 1], [], []>} : vector<2x128xbf16>, vector<128x4xbf16>, vector<2x4xf32> -> vector<2x4xf32>
    %c0_15 = arith.constant 0 : index
    %c0_16 = arith.constant 0 : index
    %19 = vector.load %arg7[%c0_15, %c0_16] : memref<1x4xf32, #tpu.memory_space<vmem>>, vector<1x4xf32>
    %20 = vector.broadcast %19 : vector<1x4xf32> to vector<2x4xf32>
    %21 = arith.addf %18, %20 : vector<2x4xf32>
    %c0_17 = arith.constant 0 : index
    %c0_18 = arith.constant 0 : index
    %22 = vector.load %arg8[%c0_17, %c0_18] : memref<2x4xf32, #tpu.memory_space<vmem>>, vector<2x4xf32>
    tpu.vector_store %arg8[%c0_17, %c0_18], %21 {strides = array<i32>} : memref<2x4xf32, #tpu.memory_space<vmem>>, vector<2x4xf32>,
    return
  }
  func.func @transform_0(%arg0: i32) -> (i32, i32) {
    %c0_i32 = arith.constant 0 : i32
    %c0_i32_0 = arith.constant 0 : i32
    return %arg0, %c0_i32 : i32, i32
  }
  func.func @transform_1(%arg0: i32) -> (i32, i32) {
    %c0_i32 = arith.constant 0 : i32
    %c0_i32_0 = arith.constant 0 : i32
    %c0_i32_1 = arith.constant 0 : i32
    return %c0_i32, %c0_i32_0 : i32, i32
  }
  func.func @transform_2(%arg0: i32) -> (i32, i32) {
    %c0_i32 = arith.constant 0 : i32
    %c0_i32_0 = arith.constant 0 : i32
    %c0_i32_1 = arith.constant 0 : i32
    return %c0_i32, %c0_i32_0 : i32, i32
  }
  func.func @transform_3(%arg0: i32) -> (i32, i32) {
    %c0_i32 = arith.constant 0 : i32
    %c0_i32_0 = arith.constant 0 : i32
    %c0_i32_1 = arith.constant 0 : i32
    return %c0_i32, %c0_i32_0 : i32, i32
  }
  func.func @transform_4(%arg0: i32) -> (i32, i32) {
    %c0_i32 = arith.constant 0 : i32
    %c0_i32_0 = arith.constant 0 : i32
    %c0_i32_1 = arith.constant 0 : i32
    return %c0_i32, %c0_i32_0 : i32, i32
  }
  func.func @transform_5(%arg0: i32) -> (i32, i32) {
    %c0_i32 = arith.constant 0 : i32
    %c0_i32_0 = arith.constant 0 : i32
    %c0_i32_1 = arith.constant 0 : i32
    return %c0_i32, %c0_i32_0 : i32, i32
  }
  func.func @transform_6(%arg0: i32) -> (i32, i32) {
    %c0_i32 = arith.constant 0 : i32
    %c0_i32_0 = arith.constant 0 : i32
    %c0_i32_1 = arith.constant 0 : i32
    return %c0_i32, %c0_i32_0 : i32, i32
  }
  func.func @transform_7(%arg0: i32) -> (i32, i32) {
    %c0_i32 = arith.constant 0 : i32
    %c0_i32_0 = arith.constant 0 : i32
    return %arg0, %c0_i32 : i32, i32
  }
}

</mosaic_0001>

<llo_original>
// kernel: dqn_forward.1
$region0: #{dqn_forward.1}
  #allocation0 [shape = 'u32[]', space=smem, size = 0x4, offset = 0x4, fixed_abs, tag = 'smem constant byte address 0x4 - core index']
  #allocation1 [shape = 'u32[144,128]{1,0:T(1,128)}', space=vmem, size = 0x12000, scoped, tag = 'internal scratch']
  %s0 = inlined_call_operand.vmem [shape: bf16[2,32], index: 0, kind: input, shape index: {}]
  %s1 = inlined_call_operand.vmem [shape: bf16[32,256], index: 1, kind: input, shape index: {}]
  %s2 = inlined_call_operand.vmem [shape: f32[1,256], index: 2, kind: input, shape index: {}]
  %s3 = inlined_call_operand.hbm [shape: bf16[256,128], index: 3, kind: input, shape index: {}]
  %s4 = inlined_call_operand.vmem [shape: f32[1,128], index: 4, kind: input, shape index: {}]
  %s5 = inlined_call_operand.vmem [shape: bf16[128,4], index: 5, kind: input, shape index: {}]
  %s6 = inlined_call_operand.vmem [shape: f32[1,4], index: 6, kind: input, shape index: {}]
  %s7 = inlined_call_operand.hbm [shape: f32[2,4], index: 7, kind: output, shape index: {}]
  %s8 = sld [smem:[#allocation0]]
  $region42: #{dqn_forward.1} parent=0
    _
  %s10 = ssub.s32 1, %s8
  %s11 = scalar_select 0, %s10, %s8
  $region1: #{dqn_forward.1} parent=0
    #allocation2 [shape = 'u8[65536]{0}', space=vmem, size = 0x10000, scoped, tag = 'input window, operand 3, single buffered']
    #allocation3 [shape = 's32[1]{0}', space=sflag, size = 0x4, scoped, tag = 'scoped memory for dqn_forward.1']
    #allocation4 [shape = 's32[1]{0}', space=sflag, size = 0x4, scoped, tag = 'scoped memory for dqn_forward.1']
    #allocation5 [shape = 'u8[1024]{0}', space=vmem, size = 0x400, scoped, tag = 'output window, operand 0, single buffered']
    %12 = vsyncpa [#allocation3], 0
    %13 = vsyncpa [#allocation4], 0
    // Predicated region
    $region2: #{dqn_forward.1} parent=1 // pred_check
      _
    $region3: #{dqn_forward.1} parent=1 // pred_check_branch
      %15 = sbr.rel (0) target = $region5
    $region4: #{dqn_forward.1} parent=1 // pred_region
      _
    $region5: #{dqn_forward.1} parent=1 // pred_fallthru
      _
    // Predicated region
    $region6: #{dqn_forward.1} parent=1 // pred_check
      _
    $region7: #{dqn_forward.1} parent=1 // pred_check_branch
      %17 = sbr.rel (0) target = $region9
    $region8: #{dqn_forward.1} parent=1 // pred_region
      _
    $region9: #{dqn_forward.1} parent=1 // pred_fallthru
      _
    // Predicated region
    $region10: #{dqn_forward.1} parent=1 // pred_check
      _
    $region11: #{dqn_forward.1} parent=1 // pred_check_branch
      %19 = sbr.rel (0) target = $region13
    $region12: #{dqn_forward.1} parent=1 // pred_region
      _
    $region13: #{dqn_forward.1} parent=1 // pred_fallthru
      _
    // Predicated region
    $region14: #{dqn_forward.1} parent=1 // pred_check
      _
    $region15: #{dqn_forward.1} parent=1 // pred_check_branch
      %21 = sbr.rel (0) target = $region17
    $region16: #{dqn_forward.1} parent=1 // pred_region
      %s23 = ssub.s32 2048, 2048
      %24 = vsyncadd [#allocation3], %s23
      %s25 = sshll.u32 [#allocation2], 4
      %s26 = int_to_ptr.vmem [resolvable:$true] %s25
      %31 = dma.hbm_to_vmem [thread:$0]  %s3, 2048, %s26, [#allocation3], 64, 64, 4
    $region17: #{dqn_forward.1} parent=1 // pred_fallthru
      _
    // Predicated region
    $region18: #{dqn_forward.1} parent=1 // pred_check
      _
    $region19: #{dqn_forward.1} parent=1 // pred_check_branch
      %33 = sbr.rel (0) target = $region21
    $region20: #{dqn_forward.1} parent=1 // pred_region
      _
    $region21: #{dqn_forward.1} parent=1 // pred_fallthru
      _
    // Predicated region
    $region22: #{dqn_forward.1} parent=1 // pred_check
      _
    $region23: #{dqn_forward.1} parent=1 // pred_check_branch
      %35 = sbr.rel (0) target = $region25
    $region24: #{dqn_forward.1} parent=1 // pred_region
      _
    $region25: #{dqn_forward.1} parent=1 // pred_fallthru
      _
    // Predicated region
    $region26: #{dqn_forward.1} parent=1 // pred_check
      _
    $region27: #{dqn_forward.1} parent=1 // pred_check_branch
      %37 = sbr.rel (0) target = $region29
    $region28: #{dqn_forward.1} parent=1 // pred_region
      _
    $region29: #{dqn_forward.1} parent=1 // pred_fallthru
      _
    // Predicated region
    $region30: #{dqn_forward.1} parent=1 // pred_check
      _
    $region31: #{dqn_forward.1} parent=1 // pred_check_branch
      %39 = sbr.rel (0) target = $region33
    $region32: #{dqn_forward.1} parent=1 // pred_region
      %40 = dma.done [#allocation3], 2048
    $region33: #{dqn_forward.1} parent=1 // pred_fallthru
      _
    %v42 = vld [vmem:[%s0] sm:$0x1]
    %v43 = vld [vmem:[%s1] sm:$0xff]
    %v44 = vld [vmem:[%s1 + $0x8] sm:$0xff]
    %v45 = vld [vmem:[%s1 + $0x10] sm:$0xff]
    %v46 = vld [vmem:[%s1 + $0x18] sm:$0xff]
    %v47 = vld [vmem:[%s2] sm:$0x3]
    %v49 = vlaneseq
    %v50 = vshrl.u32 %v49, 7
    %v51 = vsub.s32 0, %v50
    %v52 = vrot.slane %v47, %v51
    %v53 = vlaneseq
    %v54 = vshrl.u32 %v53, 7
    %v55 = vsub.s32 1, %v54
    %v56 = vrot.slane %v47, %v55
    %v63 = vunpack.c.l.b16 %v43
    %v64 = vunpack.c.h.b16 %v43
    %v65 = vunpack.c.l.b16 %v44
    %v66 = vunpack.c.h.b16 %v44
    %v67 = vunpack.c.l.b16 %v45
    %v68 = vunpack.c.h.b16 %v45
    %v69 = vunpack.c.l.b16 %v46
    %v70 = vunpack.c.h.b16 %v46
    %v71 = vpack.c.b16 %v65, %v63
    %v72 = vpack.c.b16 %v66, %v64
    %v73 = vpack.c.b16 %v69, %v67
    %v74 = vpack.c.b16 %v70, %v68
    %vm79 = vcmask 261120
    %v81 = vsel %vm79, %v42, 0
    %83 = vmatprep.subr.bf16.mxu0 %v72
    %84 = vmatpush1.bf16.msra.mxu0 %v71
    %85 = vmatprep.subr.bf16.mxu0 %v74
    %86 = vmatpush1.bf16.msra.mxu0 %v73
    %87 = vmatprep.subr.bf16.mxu0 0
    %88 = vmatpush1.bf16.msra.mxu0 0
    %89 = vmatprep.subr.bf16.mxu0 0
    %90 = vmatpush1.bf16.msra.mxu0 0
    %91 = vmatprep.subr.bf16.mxu0 0
    %92 = vmatpush1.bf16.msra.mxu0 0
    %93 = vmatprep.subr.bf16.mxu0 0
    %94 = vmatpush1.bf16.msra.mxu0 0
    %95 = vmatprep.subr.bf16.mxu0 0
    %96 = vmatpush1.bf16.msra.mxu0 0
    %97 = vmatprep.subr.bf16.mxu0 0
    %98 = vmatpush1.bf16.msra.mxu0 0
    %99 = vmatprep.subr.bf16.mxu0 0
    %100 = vmatpush1.bf16.msra.mxu0 0
    %101 = vmatprep.subr.bf16.mxu0 0
    %102 = vmatpush1.bf16.msra.mxu0 0
    %103 = vmatprep.subr.bf16.mxu0 0
    %104 = vmatpush1.bf16.msra.mxu0 0
    %105 = vmatprep.subr.bf16.mxu0 0
    %106 = vmatpush1.bf16.msra.mxu0 0
    %107 = vmatprep.subr.bf16.mxu0 0
    %108 = vmatpush1.bf16.msra.mxu0 0
    %109 = vmatprep.subr.bf16.mxu0 0
    %110 = vmatpush1.bf16.msra.mxu0 0
    %111 = vmatprep.subr.bf16.mxu0 0
    %112 = vmatpush1.bf16.msra.mxu0 0
    %113 = vmatprep.subr.bf16.mxu0 0
    %114 = vmatpush1.bf16.msra.mxu0 0
    %115 = vmatprep.mubr.bf16.mxu0 0
    %116 = vmatmul.mubr.bf16.gmra.mrb[0].mxu0 %v81
    %v117 = vpop.f32.mrb[0].mxu0
    %v118 = vadd.f32 %v52, %v117
    %v119 = vpop.f32.mrb[0].mxu0
    %v120 = vadd.f32 %v56, %v119
    %v121 = vpop.f32.mrb[0].mxu0
    %v122 = vpop.f32.mrb[0].mxu0
    %123 = vdwg.mxu0
    %v124 = vmax.f32 %v118, 0.0
    %v125 = vmax.f32 %v120, 0.0
    %v126 = vpack.c.bf16 %v124, %v124
    %v127 = vpack.c.bf16 %v125, %v125
    %v128 = vld [vmem:[#allocation2] sm:$0xf]
    %v129 = vld [vmem:[#allocation2 + $0x4] sm:$0xf]
    %v130 = vld [vmem:[#allocation2 + $0x8] sm:$0xf]
    %v131 = vld [vmem:[#allocation2 + $0xc] sm:$0xf]
    %v132 = vld [vmem:[#allocation2 + $0x10] sm:$0xf]
    %v133 = vld [vmem:[#allocation2 + $0x14] sm:$0xf]
    %v134 = vld [vmem:[#allocation2 + $0x18] sm:$0xf]
    %v135 = vld [vmem:[#allocation2 + $0x1c] sm:$0xf]
    %v136 = vld [vmem:[#allocation2 + $0x20] sm:$0xf]
    %v137 = vld [vmem:[#allocation2 + $0x24] sm:$0xf]
    %v138 = vld [vmem:[#allocation2 + $0x28] sm:$0xf]
    %v139 = vld [vmem:[#allocation2 + $0x2c] sm:$0xf]
    %v140 = vld [vmem:[#allocation2 + $0x30] sm:$0xf]
    %v141 = vld [vmem:[#allocation2 + $0x34] sm:$0xf]
    %v142 = vld [vmem:[#allocation2 + $0x38] sm:$0xf]
    %v143 = vld [vmem:[#allocation2 + $0x3c] sm:$0xf]
    %v144 = vld [vmem:[#allocation2 + $0x40] sm:$0xf]
    %v145 = vld [vmem:[#allocation2 + $0x44] sm:$0xf]
    %v146 = vld [vmem:[#allocation2 + $0x48] sm:$0xf]
    %v147 = vld [vmem:[#allocation2 + $0x4c] sm:$0xf]
    %v148 = vld [vmem:[#allocation2 + $0x50] sm:$0xf]
    %v149 = vld [vmem:[#allocation2 + $0x54] sm:$0xf]
    %v150 = vld [vmem:[#allocation2 + $0x58] sm:$0xf]
    %v151 = vld [vmem:[#allocation2 + $0x5c] sm:$0xf]
    %v152 = vld [vmem:[#allocation2 + $0x60] sm:$0xf]
    %v153 = vld [vmem:[#allocation2 + $0x64] sm:$0xf]
    %v154 = vld [vmem:[#allocation2 + $0x68] sm:$0xf]
    %v155 = vld [vmem:[#allocation2 + $0x6c] sm:$0xf]
    %v156 = vld [vmem:[#allocation2 + $0x70] sm:$0xf]
    %v157 = vld [vmem:[#allocation2 + $0x74] sm:$0xf]
    %v158 = vld [vmem:[#allocation2 + $0x78] sm:$0xf]
    %v159 = vld [vmem:[#allocation2 + $0x7c] sm:$0xf]
    %v160 = vld [vmem:[%s4] sm:$0x1]
    %v162 = vlaneseq
    %v163 = vshrl.u32 %v162, 7
    %v164 = vsub.s32 0, %v163
    %v165 = vrot.slane %v160, %v164
    %v199 = vunpack.c.l.b16 %v128
    %v200 = vunpack.c.l.b16 %v129
    %v201 = vunpack.c.l.b16 %v130
    %v202 = vunpack.c.l.b16 %v131
    %v203 = vunpack.c.l.b16 %v132
    %v204 = vunpack.c.l.b16 %v133
    %v205 = vunpack.c.l.b16 %v134
    %v206 = vunpack.c.l.b16 %v135
    %v207 = vunpack.c.l.b16 %v136
    %v208 = vunpack.c.l.b16 %v137
    %v209 = vunpack.c.l.b16 %v138
    %v210 = vunpack.c.l.b16 %v139
    %v211 = vunpack.c.l.b16 %v140
    %v212 = vunpack.c.l.b16 %v141
    %v213 = vunpack.c.l.b16 %v142
    %v214 = vunpack.c.l.b16 %v143
    %v215 = vunpack.c.l.b16 %v144
    %v216 = vunpack.c.l.b16 %v145
    %v217 = vunpack.c.l.b16 %v146
    %v218 = vunpack.c.l.b16 %v147
    %v219 = vunpack.c.l.b16 %v148
    %v220 = vunpack.c.l.b16 %v149
    %v221 = vunpack.c.l.b16 %v150
    %v222 = vunpack.c.l.b16 %v151
    %v223 = vunpack.c.l.b16 %v152
    %v224 = vunpack.c.l.b16 %v153
    %v225 = vunpack.c.l.b16 %v154
    %v226 = vunpack.c.l.b16 %v155
    %v227 = vunpack.c.l.b16 %v156
    %v228 = vunpack.c.l.b16 %v157
    %v229 = vunpack.c.l.b16 %v158
    %v230 = vunpack.c.l.b16 %v159
    %v231 = vpack.c.b16 %v200, %v199
    %v232 = vpack.c.b16 %v202, %v201
    %v233 = vpack.c.b16 %v204, %v203
    %v234 = vpack.c.b16 %v206, %v205
    %v235 = vpack.c.b16 %v208, %v207
    %v236 = vpack.c.b16 %v210, %v209
    %v237 = vpack.c.b16 %v212, %v211
    %v238 = vpack.c.b16 %v214, %v213
    %v239 = vpack.c.b16 %v216, %v215
    %v240 = vpack.c.b16 %v218, %v217
    %v241 = vpack.c.b16 %v220, %v219
    %v242 = vpack.c.b16 %v222, %v221
    %v243 = vpack.c.b16 %v224, %v223
    %v244 = vpack.c.b16 %v226, %v225
    %v245 = vpack.c.b16 %v228, %v227
    %v246 = vpack.c.b16 %v230, %v229
    %263 = vmatprep.subr.bf16.mxu0 0
    %264 = vmatpush1.bf16.msra.mxu0 %v231
    %265 = vmatprep.subr.bf16.mxu0 0
    %266 = vmatpush1.bf16.msra.mxu0 %v232
    %267 = vmatprep.subr.bf16.mxu0 0
    %268 = vmatpush1.bf16.msra.mxu0 %v233
    %269 = vmatprep.subr.bf16.mxu0 0
    %270 = vmatpush1.bf16.msra.mxu0 %v234
    %271 = vmatprep.subr.bf16.mxu0 0
    %272 = vmatpush1.bf16.msra.mxu0 %v235
    %273 = vmatprep.subr.bf16.mxu0 0
    %274 = vmatpush1.bf16.msra.mxu0 %v236
    %275 = vmatprep.subr.bf16.mxu0 0
    %276 = vmatpush1.bf16.msra.mxu0 %v237
    %277 = vmatprep.subr.bf16.mxu0 0
    %278 = vmatpush1.bf16.msra.mxu0 %v238
    %279 = vmatprep.subr.bf16.mxu0 0
    %280 = vmatpush1.bf16.msra.mxu0 %v239
    %281 = vmatprep.subr.bf16.mxu0 0
    %282 = vmatpush1.bf16.msra.mxu0 %v240
    %283 = vmatprep.subr.bf16.mxu0 0
    %284 = vmatpush1.bf16.msra.mxu0 %v241
    %285 = vmatprep.subr.bf16.mxu0 0
    %286 = vmatpush1.bf16.msra.mxu0 %v242
    %287 = vmatprep.subr.bf16.mxu0 0
    %288 = vmatpush1.bf16.msra.mxu0 %v243
    %289 = vmatprep.subr.bf16.mxu0 0
    %290 = vmatpush1.bf16.msra.mxu0 %v244
    %291 = vmatprep.subr.bf16.mxu0 0
    %292 = vmatpush1.bf16.msra.mxu0 %v245
    %293 = vmatprep.subr.bf16.mxu0 0
    %294 = vmatpush1.bf16.msra.mxu0 %v246
    %295 = vmatprep.mubr.bf16.mxu0 %v127
    %296 = vmatmul.mubr.bf16.gmra.mrb[0].mxu0 %v126
    %v297 = vpop.f32.mrb[0].mxu0
    %v298 = vadd.f32 %v165, %v297
    %v299 = vpop.f32.mrb[0].mxu0
    %v300 = vpop.f32.mrb[0].mxu0
    %v301 = vpop.f32.mrb[0].mxu0
    %302 = vdwg.mxu0
    %v303 = vmax.f32 %v298, 0.0
    %v304 = vpack.c.bf16 %v303, %v303
    %v305 = vld [vmem:[%s5] sm:$0xf]
    %v306 = vld [vmem:[%s5 + $0x4] sm:$0xf]
    %v307 = vld [vmem:[%s5 + $0x8] sm:$0xf]
    %v308 = vld [vmem:[%s5 + $0xc] sm:$0xf]
    %v309 = vld [vmem:[%s5 + $0x10] sm:$0xf]
    %v310 = vld [vmem:[%s5 + $0x14] sm:$0xf]
    %v311 = vld [vmem:[%s5 + $0x18] sm:$0xf]
    %v312 = vld [vmem:[%s5 + $0x1c] sm:$0xf]
    %v313 = vld [vmem:[%s5 + $0x20] sm:$0xf]
    %v314 = vld [vmem:[%s5 + $0x24] sm:$0xf]
    %v315 = vld [vmem:[%s5 + $0x28] sm:$0xf]
    %v316 = vld [vmem:[%s5 + $0x2c] sm:$0xf]
    %v317 = vld [vmem:[%s5 + $0x30] sm:$0xf]
    %v318 = vld [vmem:[%s5 + $0x34] sm:$0xf]
    %v319 = vld [vmem:[%s5 + $0x38] sm:$0xf]
    %v320 = vld [vmem:[%s5 + $0x3c] sm:$0xf]
    %v321 = vld [vmem:[%s6] sm:$0x1]
    %v323 = vlaneseq
    %v324 = vshrl.u32 %v323, 7
    %v325 = vsub.s32 0, %v324
    %v326 = vrot.slane %v321, %v325
    %v344 = vunpack.c.l.b16 %v305
    %v345 = vunpack.c.l.b16 %v306
    %v346 = vunpack.c.l.b16 %v307
    %v347 = vunpack.c.l.b16 %v308
    %v348 = vunpack.c.l.b16 %v309
    %v349 = vunpack.c.l.b16 %v310
    %v350 = vunpack.c.l.b16 %v311
    %v351 = vunpack.c.l.b16 %v312
    %v352 = vunpack.c.l.b16 %v313
    %v353 = vunpack.c.l.b16 %v314
    %v354 = vunpack.c.l.b16 %v315
    %v355 = vunpack.c.l.b16 %v316
    %v356 = vunpack.c.l.b16 %v317
    %v357 = vunpack.c.l.b16 %v318
    %v358 = vunpack.c.l.b16 %v319
    %v359 = vunpack.c.l.b16 %v320
    %v360 = vpack.c.b16 %v345, %v344
    %v361 = vpack.c.b16 %v347, %v346
    %v362 = vpack.c.b16 %v349, %v348
    %v363 = vpack.c.b16 %v351, %v350
    %v364 = vpack.c.b16 %v353, %v352
    %v365 = vpack.c.b16 %v355, %v354
    %v366 = vpack.c.b16 %v357, %v356
    %v367 = vpack.c.b16 %v359, %v358
    %376 = vmatprep.subr.bf16.mxu0 0
    %377 = vmatpush1.bf16.msra.mxu0 %v360
    %378 = vmatprep.subr.bf16.mxu0 0
    %379 = vmatpush1.bf16.msra.mxu0 %v361
    %380 = vmatprep.subr.bf16.mxu0 0
    %381 = vmatpush1.bf16.msra.mxu0 %v362
    %382 = vmatprep.subr.bf16.mxu0 0
    %383 = vmatpush1.bf16.msra.mxu0 %v363
    %384 = vmatprep.subr.bf16.mxu0 0
    %385 = vmatpush1.bf16.msra.mxu0 %v364
    %386 = vmatprep.subr.bf16.mxu0 0
    %387 = vmatpush1.bf16.msra.mxu0 %v365
    %388 = vmatprep.subr.bf16.mxu0 0
    %389 = vmatpush1.bf16.msra.mxu0 %v366
    %390 = vmatprep.subr.bf16.mxu0 0
    %391 = vmatpush1.bf16.msra.mxu0 %v367
    %392 = vmatprep.subr.bf16.mxu0 0
    %393 = vmatpush1.bf16.msra.mxu0 0
    %394 = vmatprep.subr.bf16.mxu0 0
    %395 = vmatpush1.bf16.msra.mxu0 0
    %396 = vmatprep.subr.bf16.mxu0 0
    %397 = vmatpush1.bf16.msra.mxu0 0
    %398 = vmatprep.subr.bf16.mxu0 0
    %399 = vmatpush1.bf16.msra.mxu0 0
    %400 = vmatprep.subr.bf16.mxu0 0
    %401 = vmatpush1.bf16.msra.mxu0 0
    %402 = vmatprep.subr.bf16.mxu0 0
    %403 = vmatpush1.bf16.msra.mxu0 0
    %404 = vmatprep.subr.bf16.mxu0 0
    %405 = vmatpush1.bf16.msra.mxu0 0
    %406 = vmatprep.subr.bf16.mxu0 0
    %407 = vmatpush1.bf16.msra.mxu0 0
    %408 = vmatprep.mubr.bf16.mxu0 0
    %409 = vmatmul.mubr.bf16.gmra.mrb[0].mxu0 %v304
    %v410 = vpop.f32.mrb[0].mxu0
    %v411 = vadd.f32 %v326, %v410
    %v412 = vpop.f32.mrb[0].mxu0
    %v413 = vpop.f32.mrb[0].mxu0
    %v414 = vpop.f32.mrb[0].mxu0
    %415 = vdwg.mxu0
    %vm416 = vcmask 25600
    %417 = vst.msk [vmem:[#allocation5] sm:$0x3] %vm416, %v411
    // Predicated region
    $region34: #{dqn_forward.1} parent=1 // pred_check
      _
    $region35: #{dqn_forward.1} parent=1 // pred_check_branch
      %419 = sbr.rel (0) target = $region37
    $region36: #{dqn_forward.1} parent=1 // pred_region
      %s421 = ssub.s32 32, 32
      %422 = vsyncadd [#allocation4], %s421
      %s424 = sshll.u32 [#allocation5], 4
      %s425 = int_to_ptr.vmem [resolvable:$true] %s424
      %427 = dma.vmem_to_hbm [thread:$0]  %s425, 32, %s7, [#allocation4]
    $region37: #{dqn_forward.1} parent=1 // pred_fallthru
      _
    // Predicated region
    $region38: #{dqn_forward.1} parent=1 // pred_check
      _
    $region39: #{dqn_forward.1} parent=1 // pred_check_branch
      %429 = sbr.rel (0) target = $region41
    $region40: #{dqn_forward.1} parent=1 // pred_region
      %430 = dma.done [#allocation4], 32
    $region41: #{dqn_forward.1} parent=1 // pred_fallthru
      _
    %431 = vsyncpa [#allocation3], 1
    %432 = vsyncpa [#allocation4], 1

</llo_original>
